<compile_context>
chip_gen: v7x
topology: tpu7x:2x2x1
jax: 0.10.0
libtpu: 0.0.40
codegen_flags: <defaults>
</compile_context>

<pallas_src>
import functools

import jax
import jax.numpy as jnp
from jax.experimental import pallas as pl
from jax.experimental.pallas import tpu as pltpu


# ---------------------------------------------------------------------------
# Kernels
# ---------------------------------------------------------------------------

def _fused_kernel(x_ref, w_ref, b_ref, o_ref, *, compute_dtype):
    """Single-pass: min over the (fully resident) set dim + matmul.

    x_ref : (TB, N, D_in)      slab of TB whole sets
    w_ref : (D_in, D_out_p)    weight, pre-transposed & pre-cast in wrapper
    b_ref : (1, D_out_p)       bias (f32, zero-padded to lane multiple)
    o_ref : (TB, N, D_out_p)
    """
    tb, n, d_in = x_ref.shape
    d_out = w_ref.shape[1]

    x = x_ref[...]
    xm = jnp.min(x, axis=1, keepdims=True)     # (TB, 1, D_in) sublane reduce (XLU)
    xc = x - xm                                # subtract in the input dtype

    # (TB, N) -> rows: one big MXU matmul per grid step instead of TB tiny ones.
    # N is normally a multiple of the sublane pack (8 for f32), so this reshape
    # is layout-preserving.
    lhs = xc.reshape(tb * n, d_in).astype(compute_dtype)
    y = jnp.dot(lhs, w_ref[...], preferred_element_type=jnp.float32)
    y = y + b_ref[...]                         # broadcast (1, D_out_p), f32
    o_ref[...] = y.reshape(tb, n, d_out).astype(o_ref.dtype)


def _tiled_kernel(x_ref, c_ref, w_ref, o_ref, *, compute_dtype):
    """Large-N fallback: the min is precomputed in the wrapper and folded into a
    per-batch bias correction c = b - xmin @ W.T, so the kernel is a plain
    matmul + add (no subtract, no extra D_in-wide input stream).

    x_ref : (TB, TN, D_in)
    c_ref : (TB, 1, D_out_p)   f32
    w_ref : (D_in, D_out_p)
    o_ref : (TB, TN, D_out_p)
    """
    tb, tn, d_in = x_ref.shape
    d_out = w_ref.shape[1]

    lhs = x_ref[...].reshape(tb * tn, d_in).astype(compute_dtype)
    y = jnp.dot(lhs, w_ref[...], preferred_element_type=jnp.float32)
    y = y.reshape(tb, tn, d_out) + c_ref[...]
    o_ref[...] = y.astype(o_ref.dtype)


# ---------------------------------------------------------------------------
# Tiling / sizing helpers
# ---------------------------------------------------------------------------

def _largest_divisor(n, cap):
    cap = max(1, min(n, cap))
    for d in range(cap, 0, -1):
        if n % d == 0:
            return d
    return 1


def _largest_divisor_pref(n, cap, multiple):
    """Largest divisor of n <= cap, preferring multiples of `multiple`."""
    cap = max(1, min(n, cap))
    best = None
    for d in range(cap, 0, -1):
        if n % d == 0:
            if d % multiple == 0:
                return d
            if best is None:
                best = d
    return best or 1


def _vmem_capacity_bytes():
    try:
        info = pltpu.get_tpu_info()
        cap = int(getattr(info, "vmem_capacity_bytes", 0))
        if cap > 0:
            return cap
    except Exception:
        pass
    return 64 * 1024 * 1024  # conservative default (v7x per-TensorCore VMEM)


def _vmem_limit_bytes():
    cap = _vmem_capacity_bytes()
    # ~96 MiB scoped on 128 MiB parts (v5e/v6e), ~48 MiB on 64 MiB parts (v7x
    # per TC); always leave headroom for Mosaic internal scratch.
    return max(32 * 1024 * 1024, min(int(cap * 0.75), cap - 16 * 1024 * 1024))


def _rows_cap(vmem_limit, d_in, d_out_p, x_item, out_item, cmp_item):
    """Max rows (TB*N or TB*TN) per grid step that fit the VMEM budget.

    Accounts for: the weight (counted double-buffered so the non-Buffered(1)
    retry also fits), bias/correction slack, the double-buffered x/out streams,
    and the in-kernel intermediates (subtract result, compute-dtype copy,
    f32 accumulator)."""
    fixed = 2 * d_in * d_out_p * cmp_item              # weight (x2 conservative)
    fixed += 2 * 128 * d_out_p * 4                     # bias / per-batch c slack
    per_row = (
        2 * d_in * x_item                              # x block, double-buffered
        + 2 * d_out_p * out_item                       # out block, double-buffered
        + d_in * x_item                                # (x - xmin) intermediate
        + (d_in * cmp_item if cmp_item != x_item else 0)   # compute-dtype copy
        + d_out_p * 4                                  # f32 accumulator
    )
    margin = 4 * 1024 * 1024
    budget = vmem_limit - fixed - margin
    rows = budget // per_row if budget > 0 else 0
    # Past ~4K rows the ~0.35 us/step overhead is already well amortized.
    return int(max(8, min(rows, 4096)))


def _resolve_compute_dtype(compute_dtype, x_dtype, d_in, d_out):
    if compute_dtype not in (None, "auto"):
        return jnp.dtype(compute_dtype)
    x_dtype = jnp.dtype(x_dtype)
    # bf16 MXU operands only pay off once the matmul (not HBM) is the binding
    # unit: x stays f32 in HBM so an in-kernel cast doesn't reduce DMA bytes,
    # and on v5e (no bf16 VPU) it only adds pack ops.
    if x_dtype == jnp.dtype(jnp.float32) and min(d_in, d_out) >= 256:
        return jnp.dtype(jnp.bfloat16)
    return x_dtype


# ---------------------------------------------------------------------------
# Public wrapper
# ---------------------------------------------------------------------------

def perm_equi1_min(x, weight, bias, *, compute_dtype="auto", force_tiled=False):
    """PermEqui1_min forward.

    x      : (B, N, D_in)
    weight : (D_out, D_in)   PyTorch nn.Linear layout
    bias   : (D_out,)
    Returns (B, N, D_out) in x.dtype.  `force_tiled` exercises the large-N
    fallback path (normally chosen automatically when N doesn't fit VMEM).
    """
    B, N, D_in = x.shape
    D_out = weight.shape[0]
    compute_dtype = _resolve_compute_dtype(compute_dtype, x.dtype, D_in, D_out)

    # Lane-dense output: pad D_out to a multiple of 128 (avoids masked vst.msk
    # partial stores), slice the padding off after the call.
    D_out_p = int(pl.cdiv(D_out, 128) * 128)

    # Weight: transpose to (D_in, D_out) (canonical MXU (M,K)x(K,N)) and cast to
    # the compute dtype ONCE here instead of per grid step inside the kernel.
    w_t32 = weight.T.astype(jnp.float32)
    bias_f32 = bias.astype(jnp.float32)
    if D_out_p != D_out:
        w_t32 = jnp.pad(w_t32, ((0, 0), (0, D_out_p - D_out)))
        bias_f32 = jnp.pad(bias_f32, (0, D_out_p - D_out))
    w_t = w_t32.astype(compute_dtype)
    b2 = bias_f32.reshape(1, D_out_p)

    x_item = jnp.dtype(x.dtype).itemsize
    cmp_item = jnp.dtype(compute_dtype).itemsize
    vmem_limit = _vmem_limit_bytes()
    rows_cap = _rows_cap(vmem_limit, D_in, D_out_p, x_item, x_item, cmp_item)
    # TODO(synk): weights larger than the VMEM budget (huge D_in*D_out) would
    # additionally need K/N tiling of W; not required for Deep Sets configs.

    cost = pl.CostEstimate(
        flops=2 * B * N * D_in * D_out_p,
        transcendentals=0,
        bytes_accessed=(x.size * x_item
                        + D_in * D_out_p * cmp_item
                        + D_out_p * 4
                        + B * N * D_out_p * x_item),
    )

    use_fused = (not force_tiled) and N <= rows_cap

    if use_fused:
        # Grid over B only; the whole set (N) is resident so the min fuses in.
        TB = _largest_divisor(B, max(1, rows_cap // N))
        if B >= 2 and B // TB < 2:
            TB = _largest_divisor(B, B // 2)   # >= 2 grid steps for megacore / 2 TCs
        grid = (B // TB,)
        kernel = functools.partial(_fused_kernel, compute_dtype=compute_dtype)

        def make_call(single_buffer_params):
            pm = dict(pipeline_mode=pl.Buffered(1)) if single_buffer_params else {}
            return pl.pallas_call(
                kernel,
                out_shape=jax.ShapeDtypeStruct((B, N, D_out_p), x.dtype),
                grid_spec=pltpu.PrefetchScalarGridSpec(
                    num_scalar_prefetch=0,
                    grid=grid,
                    in_specs=[
                        pl.BlockSpec((TB, N, D_in), lambda b: (b, 0, 0)),
                        pl.BlockSpec((D_in, D_out_p), lambda b: (0, 0), **pm),
                        pl.BlockSpec((1, D_out_p), lambda b: (0, 0), **pm),
                    ],
                    out_specs=pl.BlockSpec((TB, N, D_out_p), lambda b: (b, 0, 0)),
                ),
                compiler_params=pltpu.CompilerParams(
                    dimension_semantics=("parallel",),
                    vmem_limit_bytes=vmem_limit),
                cost_estimate=cost,
            )

        args = (x, w_t, b2)

    else:
        # Large-N fallback: wrapper-side min folded into a per-batch bias
        # correction so the kernel does a plain x @ W + c[b].
        xmin = jnp.min(x, axis=1, keepdims=True).astype(jnp.float32)  # (B,1,D_in)
        c = bias_f32.reshape(1, 1, D_out_p) - jnp.einsum(
            "bkd,do->bko", xmin, w_t32)                               # (B,1,D_out_p) f32

        pack = {4: 8, 2: 16, 1: 32}.get(x_item, 8)
        TN = _largest_divisor_pref(N, rows_cap, pack)
        TB = _largest_divisor(B, max(1, rows_cap // TN))
        if B >= 2 and (B // TB) * (N // TN) < 2:
            TB = _largest_divisor(B, B // 2)   # >= 2 grid steps for megacore / 2 TCs
        # TODO(synk): when N % 8 != 0 the (TB,TN,D_in)->(TB*TN,D_in) reshape may
        # cost a relayout; padding N to a multiple of 8 would avoid it.
        grid = (B // TB, N // TN)
        kernel = functools.partial(_tiled_kernel, compute_dtype=compute_dtype)

        def make_call(single_buffer_params):
            pm = dict(pipeline_mode=pl.Buffered(1)) if single_buffer_params else {}
            return pl.pallas_call(
                kernel,
                out_shape=jax.ShapeDtypeStruct((B, N, D_out_p), x.dtype),
                grid_spec=pltpu.PrefetchScalarGridSpec(
                    num_scalar_prefetch=0,
                    grid=grid,
                    in_specs=[
                        pl.BlockSpec((TB, TN, D_in), lambda b, n: (b, n, 0)),
                        pl.BlockSpec((TB, 1, D_out_p), lambda b, n: (b, 0, 0)),
                        pl.BlockSpec((D_in, D_out_p), lambda b, n: (0, 0), **pm),
                    ],
                    out_specs=pl.BlockSpec((TB, TN, D_out_p), lambda b, n: (b, n, 0)),
                ),
                compiler_params=pltpu.CompilerParams(
                    dimension_semantics=("parallel", "parallel"),
                    vmem_limit_bytes=vmem_limit),
                cost_estimate=cost,
            )

        args = (x, c, w_t)

    # Grid-invariant W / bias are requested single-buffered (frees VMEM for
    # bigger slabs); if the installed JAX/Mosaic rejects pipeline_mode on a
    # top-level BlockSpec, retry with default double-buffered specs (the tile
    # budget above is sized for that case, so both variants fit).
    try:
        out_p = make_call(True)(*args)
    except Exception:
        out_p = make_call(False)(*args)

    return out_p[..., :D_out] if D_out_p != D_out else out_p


def perm_equi1_min_ref(x, weight, bias):
    xm = jnp.min(x, axis=1, keepdims=True)
    return (x - xm) @ weight.T + bias


if __name__ == "__main__":
    B, N, D_in, D_out = 2, 8, 32, 32

    key = jax.random.PRNGKey(0)
    kx, kw, kb = jax.random.split(key, 3)

    x = jax.random.normal(kx, (B, N, D_in), dtype=jnp.float32)

    # Deterministic init matching nn.Linear's default U(-1/sqrt(in_dim), 1/sqrt(in_dim))
    bound = 1.0 / (D_in ** 0.5)
    weight = jax.random.uniform(kw, (D_out, D_in), jnp.float32, -bound, bound)
    bias = jax.random.uniform(kb, (D_out,), jnp.float32, -bound, bound)

    ref = perm_equi1_min_ref(x, weight, bias)

    # Default path (auto -> f32 compute at these sizes), fused single-pass min.
    out = jax.block_until_ready(perm_equi1_min(x, weight, bias))
    assert out.shape == (B, N, D_out)
    assert jnp.allclose(out, ref, atol=1e-5, rtol=1e-5), "fused f32 mismatch vs reference"

    # Large-N fallback path (min folded into the per-batch bias correction).
    out_t = jax.block_until_ready(perm_equi1_min(x, weight, bias, force_tiled=True))
    assert jnp.allclose(out_t, ref, atol=1e-4, rtol=1e-4), "tiled f32 mismatch vs reference"

    # Explicit bf16 MXU-operand path (v6e/v7x): looser tolerance.
    out_bf16 = jax.block_until_ready(
        perm_equi1_min(x, weight, bias, compute_dtype=jnp.bfloat16))
    assert jnp.allclose(out_bf16, ref, atol=5e-2, rtol=5e-2), "bf16 mismatch vs reference"

    print("KERNEL_OK")
</pallas_src>

<mosaic_0001>
module attributes {stable_mosaic.version = 11 : i64} {
  func.func @_fused_kernel(%arg0: i32, %arg1: memref<1x8x32xf32, #tpu.memory_space<vmem>>, %arg2: memref<32x128xf32, #tpu.memory_space<vmem>>, %arg3: memref<1x128xf32, #tpu.memory_space<vmem>>, %arg4: memref<1x8x128xf32, #tpu.memory_space<vmem>>) attributes {dimension_semantics = [#tpu.dimension_semantics<parallel>], iteration_bounds = array<i64: 2>, scalar_prefetch = 0 : i64, scratch_operands = 0 : i64, tpu.core_type = #tpu.core_type<tc>, window_params = [{transform_indices = @transform_0, window_bounds = array<i64: 1, 8, 32>}, {pipeline_mode = #tpu.pipeline_mode<synchronous>, transform_indices = @transform_1, window_bounds = array<i64: 32, 128>}, {pipeline_mode = #tpu.pipeline_mode<synchronous>, transform_indices = @transform_2, window_bounds = array<i64: 1, 128>}, {transform_indices = @transform_3, window_bounds = array<i64: 1, 8, 128>}]} {
    %c0 = arith.constant 0 : index
    %c0_0 = arith.constant 0 : index
    %c0_1 = arith.constant 0 : index
    %0 = vector.load %arg1[%c0, %c0_0, %c0_1] : memref<1x8x32xf32, #tpu.memory_space<vmem>>, vector<1x8x32xf32>
    %cst = arith.constant dense<0x7F800000> : vector<1x32xf32>
    %1 = vector.multi_reduction <minimumf>, %0, %cst [1] : vector<1x8x32xf32> to vector<1x32xf32>
    %2 = vector.shape_cast %1 : vector<1x32xf32> to vector<1x1x32xf32>
    %3 = vector.broadcast %2 : vector<1x1x32xf32> to vector<1x8x32xf32>
    %4 = arith.subf %0, %3 : vector<1x8x32xf32>
    %5 = vector.shape_cast %4 : vector<1x8x32xf32> to vector<8x32xf32>
    %c0_2 = arith.constant 0 : index
    %c0_3 = arith.constant 0 : index
    %6 = vector.load %arg2[%c0_2, %c0_3] : memref<32x128xf32, #tpu.memory_space<vmem>>, vector<32x128xf32>
    %cst_4 = arith.constant dense<0.000000e+00> : vector<8x128xf32>
    %7 = tpu.matmul %5, %6, %cst_4 {dimension_numbers = #tpu.dot_dimension_numbers<[1], [0], [0], [1], [0, 0, 1, 1], [], []>} : vector<8x32xf32>, vector<32x128xf32>, vector<8x128xf32> -> vector<8x128xf32>
    %c0_5 = arith.constant 0 : index
    %c0_6 = arith.constant 0 : index
    %8 = vector.load %arg3[%c0_5, %c0_6] : memref<1x128xf32, #tpu.memory_space<vmem>>, vector<1x128xf32>
    %9 = vector.broadcast %8 : vector<1x128xf32> to vector<8x128xf32>
    %10 = arith.addf %7, %9 : vector<8x128xf32>
    %11 = vector.shape_cast %10 : vector<8x128xf32> to vector<1x8x128xf32>
    %c0_7 = arith.constant 0 : index
    %c0_8 = arith.constant 0 : index
    %c0_9 = arith.constant 0 : index
    %12 = vector.load %arg4[%c0_7, %c0_8, %c0_9] : memref<1x8x128xf32, #tpu.memory_space<vmem>>, vector<1x8x128xf32>
    tpu.vector_store %arg4[%c0_7, %c0_8, %c0_9], %11 {strides = array<i32>} : memref<1x8x128xf32, #tpu.memory_space<vmem>>, vector<1x8x128xf32>,
    return
  }
  func.func @transform_0(%arg0: i32) -> (i32, i32, i32) {
    %c0_i32 = arith.constant 0 : i32
    %c0_i32_0 = arith.constant 0 : i32
    %c0_i32_1 = arith.constant 0 : i32
    return %arg0, %c0_i32, %c0_i32_0 : i32, i32, i32
  }
  func.func @transform_1(%arg0: i32) -> (i32, i32) {
    %c0_i32 = arith.constant 0 : i32
    %c0_i32_0 = arith.constant 0 : i32
    %c0_i32_1 = arith.constant 0 : i32
    return %c0_i32, %c0_i32_0 : i32, i32
  }
  func.func @transform_2(%arg0: i32) -> (i32, i32) {
    %c0_i32 = arith.constant 0 : i32
    %c0_i32_0 = arith.constant 0 : i32
    %c0_i32_1 = arith.constant 0 : i32
    return %c0_i32, %c0_i32_0 : i32, i32
  }
  func.func @transform_3(%arg0: i32) -> (i32, i32, i32) {
    %c0_i32 = arith.constant 0 : i32
    %c0_i32_0 = arith.constant 0 : i32
    %c0_i32_1 = arith.constant 0 : i32
    return %arg0, %c0_i32, %c0_i32_0 : i32, i32, i32
  }
}

module attributes {stable_mosaic.version = 11 : i64} {
  func.func @_fused_kernel(%arg0: i32, %arg1: memref<1x8x32xf32, #tpu.memory_space<vmem>>, %arg2: memref<32x128xf32, #tpu.memory_space<vmem>>, %arg3: memref<1x128xf32, #tpu.memory_space<vmem>>, %arg4: memref<1x8x128xf32, #tpu.memory_space<vmem>>) attributes {dimension_semantics = [#tpu.dimension_semantics<parallel>], iteration_bounds = array<i64: 2>, scalar_prefetch = 0 : i64, scratch_operands = 0 : i64, tpu.core_type = #tpu.core_type<tc>, window_params = [{transform_indices = @transform_0, window_bounds = array<i64: 1, 8, 32>}, {pipeline_mode = #tpu.pipeline_mode<synchronous>, transform_indices = @transform_1, window_bounds = array<i64: 32, 128>}, {pipeline_mode = #tpu.pipeline_mode<synchronous>, transform_indices = @transform_2, window_bounds = array<i64: 1, 128>}, {transform_indices = @transform_3, window_bounds = array<i64: 1, 8, 128>}]} {
    %c0 = arith.constant 0 : index
    %c0_0 = arith.constant 0 : index
    %c0_1 = arith.constant 0 : index
    %0 = vector.load %arg1[%c0, %c0_0, %c0_1] : memref<1x8x32xf32, #tpu.memory_space<vmem>>, vector<1x8x32xf32>
    %cst = arith.constant dense<0x7F800000> : vector<1x32xf32>
    %1 = vector.multi_reduction <minimumf>, %0, %cst [1] : vector<1x8x32xf32> to vector<1x32xf32>
    %2 = vector.shape_cast %1 : vector<1x32xf32> to vector<1x1x32xf32>
    %3 = vector.broadcast %2 : vector<1x1x32xf32> to vector<1x8x32xf32>
    %4 = arith.subf %0, %3 : vector<1x8x32xf32>
    %5 = vector.shape_cast %4 : vector<1x8x32xf32> to vector<8x32xf32>
    %c0_2 = arith.constant 0 : index
    %c0_3 = arith.constant 0 : index
    %6 = vector.load %arg2[%c0_2, %c0_3] : memref<32x128xf32, #tpu.memory_space<vmem>>, vector<32x128xf32>
    %cst_4 = arith.constant dense<0.000000e+00> : vector<8x128xf32>
    %7 = tpu.matmul %5, %6, %cst_4 {dimension_numbers = #tpu.dot_dimension_numbers<[1], [0], [0], [1], [0, 0, 1, 1], [], []>} : vector<8x32xf32>, vector<32x128xf32>, vector<8x128xf32> -> vector<8x128xf32>
    %c0_5 = arith.constant 0 : index
    %c0_6 = arith.constant 0 : index
    %8 = vector.load %arg3[%c0_5, %c0_6] : memref<1x128xf32, #tpu.memory_space<vmem>>, vector<1x128xf32>
    %9 = vector.broadcast %8 : vector<1x128xf32> to vector<8x128xf32>
    %10 = arith.addf %7, %9 : vector<8x128xf32>
    %11 = vector.shape_cast %10 : vector<8x128xf32> to vector<1x8x128xf32>
    %c0_7 = arith.constant 0 : index
    %c0_8 = arith.constant 0 : index
    %c0_9 = arith.constant 0 : index
    %12 = vector.load %arg4[%c0_7, %c0_8, %c0_9] : memref<1x8x128xf32, #tpu.memory_space<vmem>>, vector<1x8x128xf32>
    tpu.vector_store %arg4[%c0_7, %c0_8, %c0_9], %11 {strides = array<i32>} : memref<1x8x128xf32, #tpu.memory_space<vmem>>, vector<1x8x128xf32>,
    return
  }
  func.func @transform_0(%arg0: i32) -> (i32, i32, i32) {
    %c0_i32 = arith.constant 0 : i32
    %c0_i32_0 = arith.constant 0 : i32
    %c0_i32_1 = arith.constant 0 : i32
    return %arg0, %c0_i32, %c0_i32_0 : i32, i32, i32
  }
  func.func @transform_1(%arg0: i32) -> (i32, i32) {
    %c0_i32 = arith.constant 0 : i32
    %c0_i32_0 = arith.constant 0 : i32
    %c0_i32_1 = arith.constant 0 : i32
    return %c0_i32, %c0_i32_0 : i32, i32
  }
  func.func @transform_2(%arg0: i32) -> (i32, i32) {
    %c0_i32 = arith.constant 0 : i32
    %c0_i32_0 = arith.constant 0 : i32
    %c0_i32_1 = arith.constant 0 : i32
    return %c0_i32, %c0_i32_0 : i32, i32
  }
  func.func @transform_3(%arg0: i32) -> (i32, i32, i32) {
    %c0_i32 = arith.constant 0 : i32
    %c0_i32_0 = arith.constant 0 : i32
    %c0_i32_1 = arith.constant 0 : i32
    return %arg0, %c0_i32, %c0_i32_0 : i32, i32, i32
  }
}

</mosaic_0001>

<llo_original>
// kernel: tpu_custom_call.1
$region0: #{tpu_custom_call.1}
  #allocation0 [shape = 'u32[]', space=smem, size = 0x4, offset = 0x4, fixed_abs, tag = 'smem constant byte address 0x4 - core index']
  #allocation1 [shape = 'u32[144,128]{1,0:T(1,128)}', space=vmem, size = 0x12000, scoped, tag = 'internal scratch']
  %s0 = inlined_call_operand.hbm [shape: f32[2,8,32], index: 0, kind: input, shape index: {}]
  %s1 = inlined_call_operand.hbm [shape: f32[32,128], index: 1, kind: input, shape index: {}]
  %s2 = inlined_call_operand.vmem [shape: f32[1,128], index: 2, kind: input, shape index: {}]
  %s3 = inlined_call_operand.hbm [shape: f32[2,8,128], index: 3, kind: output, shape index: {}]
  %s4 = sld [smem:[#allocation0]]
  $region53: #{tpu_custom_call.1} parent=0
    _
  %s6 = ssub.s32 1, %s4
  %s7 = scalar_select 0, %s6, %s4
  $region1: #{tpu_custom_call.1} parent=0
    #allocation2 [shape = 'u8[8192]{0}', space=vmem, size = 0x2000, scoped, tag = 'input window, operand 0']
    #allocation3 [shape = 's32[2]{0}', space=sflag, size = 0x8, scoped, tag = 'scoped memory for tpu_custom_call.1']
    #allocation4 [shape = 's32[2]{0}', space=sflag, size = 0x8, scoped, tag = 'scoped memory for tpu_custom_call.1']
    #allocation5 [shape = 'u8[16384]{0}', space=vmem, size = 0x4000, scoped, tag = 'input window, operand 1, single buffered']
    #allocation6 [shape = 's32[1]{0}', space=sflag, size = 0x4, scoped, tag = 'scoped memory for tpu_custom_call.1']
    #allocation7 [shape = 'u8[8192]{0}', space=vmem, size = 0x2000, scoped, tag = 'output window, operand 0']
    %8 = vsyncpa [#allocation3], 0
    %s9 = scalar_lea.sflag [#allocation3], 1
    %10 = vsyncpa %s9, 0
    %11 = vsyncpa [#allocation6], 0
    %12 = vsyncpa [#allocation4], 0
    %s13 = scalar_lea.sflag [#allocation4], 1
    %14 = vsyncpa %s13, 0
    loop: start=0, step=1, limit=4
    $region2: #{tpu_custom_call.1} parent=1 // loop_pre_header
      _
    $region3: #{tpu_custom_call.1} parent=1 // loop_header
      %s16 = sphi 0, %s20
      %p17 = scmp.ge.s32.totalorder %s16, 4
      %s26 = sphi 0, %s28
      %s29 = sphi 0, %s26
      %s30 = sphi 0, %s29
      %s46 = sphi 0, %s30
      %s50 = sphi 0, %s50
      %s52 = sphi 0, %s50
      %s53 = sphi 0, %s52
      %s67 = sphi 0, %s53
      %s71 = sphi 0, %s71
      %s73 = sphi 0, %s71
      %s74 = sphi 0, %s73
      %s88 = sphi 0, %s74
      %s94 = sphi 0, %s96
      %s97 = sphi 0, %s94
      %s98 = sphi 0, %s97
      %s114 = sphi 0, %s98
    $region4: #{tpu_custom_call.1} parent=1 // loop_header_branch
      %19 = sbr.rel (%p17) target = $region8
    $region5: #{tpu_custom_call.1} parent=1 // loop_body
      %s21 = ssub.s32 %s16, 1
      %s22 = ssub.s32 %s16, 2
      %s23 = sadd.s32 %s16, 1
      %s24 = ssub.s32 %s16, %s23
      %p25 = scmp.eq.s32.totalorder %s24, 0
      %s27 = sadd.s32 %s26, 1
      %s28 = scalar_select %p25, %s26, %s27
      %p31 = pneg %p25
      %p32 = scmp.eq.s32.totalorder %s16, 1
      %p33 = por %p31, %p32
      %p34 = scmp.ne.s32.totalorder %s26, %s29
      %p35 = scmp.eq.s32.totalorder %s16, 0
      %p36 = por %p34, %p35
      %p37 = scmp.ne.s32.totalorder %s26, %s29
      %p38 = scmp.eq.s32.totalorder %s21, 1
      %p39 = por %p37, %p38
      %p40 = scmp.ne.s32.totalorder %s29, %s30
      %p41 = scmp.eq.s32.totalorder %s21, 0
      %p42 = por %p40, %p41
      %p43 = scmp.ne.s32.totalorder %s29, %s30
      %p44 = scmp.eq.s32.totalorder %s22, 1
      %p45 = por %p43, %p44
      %p47 = scmp.ne.s32.totalorder %s30, %s46
      %p48 = scmp.eq.s32.totalorder %s22, 0
      %p49 = por %p47, %p48
      %s51 = sadd.s32 %s50, 1
      %p54 = scmp.eq.s32.totalorder %s16, 1
      %p55 = scmp.ne.s32.totalorder %s50, %s52
      %p56 = scmp.eq.s32.totalorder %s16, 0
      %p57 = por %p55, %p56
      %p58 = scmp.ne.s32.totalorder %s50, %s52
      %p59 = scmp.eq.s32.totalorder %s21, 1
      %p60 = por %p58, %p59
      %p61 = scmp.ne.s32.totalorder %s52, %s53
      %p62 = scmp.eq.s32.totalorder %s21, 0
      %p63 = por %p61, %p62
      %p64 = scmp.ne.s32.totalorder %s52, %s53
      %p65 = scmp.eq.s32.totalorder %s22, 1
      %p66 = por %p64, %p65
      %p68 = scmp.ne.s32.totalorder %s53, %s67
      %p69 = scmp.eq.s32.totalorder %s22, 0
      %p70 = por %p68, %p69
      %s72 = sadd.s32 %s71, 1
      %p75 = scmp.eq.s32.totalorder %s16, 1
      %p76 = scmp.ne.s32.totalorder %s71, %s73
      %p77 = scmp.eq.s32.totalorder %s16, 0
      %p78 = por %p76, %p77
      %p79 = scmp.ne.s32.totalorder %s71, %s73
      %p80 = scmp.eq.s32.totalorder %s21, 1
      %p81 = por %p79, %p80
      %p82 = scmp.ne.s32.totalorder %s73, %s74
      %p83 = scmp.eq.s32.totalorder %s21, 0
      %p84 = por %p82, %p83
      %p85 = scmp.ne.s32.totalorder %s73, %s74
      %p86 = scmp.eq.s32.totalorder %s22, 1
      %p87 = por %p85, %p86
      %p89 = scmp.ne.s32.totalorder %s74, %s88
      %p90 = scmp.eq.s32.totalorder %s22, 0
      %p91 = por %p89, %p90
      %s92 = ssub.s32 %s16, %s23
      %p93 = scmp.eq.s32.totalorder %s92, 0
      %s95 = sadd.s32 %s94, 1
      %s96 = scalar_select %p93, %s94, %s95
      %p99 = pneg %p93
      %p100 = scmp.eq.s32.totalorder %s16, 1
      %p101 = por %p99, %p100
      %p102 = scmp.ne.s32.totalorder %s94, %s97
      %p103 = scmp.eq.s32.totalorder %s16, 0
      %p104 = por %p102, %p103
      %p105 = scmp.ne.s32.totalorder %s94, %s97
      %p106 = scmp.eq.s32.totalorder %s21, 1
      %p107 = por %p105, %p106
      %p108 = scmp.ne.s32.totalorder %s97, %s98
      %p109 = scmp.eq.s32.totalorder %s21, 0
      %p110 = por %p108, %p109
      %p111 = scmp.ne.s32.totalorder %s97, %s98
      %p112 = scmp.eq.s32.totalorder %s22, 1
      %p113 = por %p111, %p112
      %p115 = scmp.ne.s32.totalorder %s98, %s114
      %p116 = scmp.eq.s32.totalorder %s22, 0
      %p117 = por %p115, %p116
      %p118 = scmp.le.s32.totalorder 1, %s16
      %p119 = scmp.lt.s32.totalorder %s16, 3
      %p120 = pnand %p118, %p119
      %p121 = pneg %p120
      // Predicated region
      $region9: #{tpu_custom_call.1} parent=5 // pred_check
        _
      $region10: #{tpu_custom_call.1} parent=5 // pred_check_branch
        %123 = sbr.rel (%p120) target = $region12
      $region11: #{tpu_custom_call.1} parent=5 // pred_region
        %s124 = ssub.s32 %s16, 1
        // Predicated region
        $region13: #{tpu_custom_call.1} parent=11 // pred_check
          %p125 = pneg %p63
        $region14: #{tpu_custom_call.1} parent=11 // pred_check_branch
          %127 = sbr.rel (%p125) target = $region16
        $region15: #{tpu_custom_call.1} parent=11 // pred_region
          %s129 = ssub.s32 512, 512
          %130 = vsyncadd [#allocation6], %s129
          %s131 = sshll.u32 [#allocation5], 4
          %s132 = int_to_ptr.vmem [resolvable:$true] %s131
          %137 = dma.hbm_to_vmem [thread:$0]  %s1, 512, %s132, [#allocation6], 128, 128, 8
        $region16: #{tpu_custom_call.1} parent=11 // pred_fallthru
          _
        // Predicated region
        $region17: #{tpu_custom_call.1} parent=11 // pred_check
          %p138 = pneg %p84
        $region18: #{tpu_custom_call.1} parent=11 // pred_check_branch
          %140 = sbr.rel (%p138) target = $region20
        $region19: #{tpu_custom_call.1} parent=11 // pred_region
          _
        $region20: #{tpu_custom_call.1} parent=11 // pred_fallthru
          _
      $region12: #{tpu_custom_call.1} parent=5 // pred_fallthru
        _
      %p141 = scmp.lt.s32.totalorder %s16, 2
      // Predicated region
      $region21: #{tpu_custom_call.1} parent=5 // pred_check
        %p142 = pneg %p141
      $region22: #{tpu_custom_call.1} parent=5 // pred_check_branch
        %144 = sbr.rel (%p142) target = $region24
      $region23: #{tpu_custom_call.1} parent=5 // pred_region
        // Predicated region
        $region25: #{tpu_custom_call.1} parent=23 // pred_check
          %p145 = pneg %p36
        $region26: #{tpu_custom_call.1} parent=23 // pred_check_branch
          %147 = sbr.rel (%p145) target = $region28
        $region27: #{tpu_custom_call.1} parent=23 // pred_region
          %s148 = sand.u32 %s26, 1
          %s149 = scalar_lea.sflag [#allocation3], %s148
          %s150 = sand.u32 %s26, 1
          %s151 = smul.addr %s150, 8
          %s152 = scalar_lea.vmem [#allocation2], %s151
          %s154 = ssub.s32 128, 128
          %155 = vsyncadd %s149, %s154
          %s156 = smul.addr %s16, 128
          %s157 = scalar_lea.hbm %s0, %s156
          %s159 = sshll.u32 %s152, 4
          %s160 = int_to_ptr.vmem [resolvable:$true] %s159
          %162 = dma.hbm_to_vmem [thread:$0]  %s157, 128, %s160, %s149
        $region28: #{tpu_custom_call.1} parent=23 // pred_fallthru
          _
      $region24: #{tpu_custom_call.1} parent=5 // pred_fallthru
        _
      %p163 = scmp.le.s32.totalorder 1, %s16
      %p164 = scmp.lt.s32.totalorder %s16, 3
      %p165 = pnand %p163, %p164
      %p166 = pneg %p165
      // Predicated region
      $region29: #{tpu_custom_call.1} parent=5 // pred_check
        _
      $region30: #{tpu_custom_call.1} parent=5 // pred_check_branch
        %168 = sbr.rel (%p165) target = $region32
      $region31: #{tpu_custom_call.1} parent=5 // pred_region
        %s169 = ssub.s32 %s16, 1
        %s170 = sand.u32 %s29, 1
        %s171 = scalar_lea.sflag [#allocation3], %s170
        %s172 = sand.u32 %s29, 1
        %s173 = smul.addr %s172, 8
        %s174 = scalar_lea.vmem [#allocation2], %s173
        // Predicated region
        $region33: #{tpu_custom_call.1} parent=31 // pred_check
          %p175 = pneg %p42
        $region34: #{tpu_custom_call.1} parent=31 // pred_check_branch
          %177 = sbr.rel (%p175) target = $region36
        $region35: #{tpu_custom_call.1} parent=31 // pred_region
          %178 = dma.done %s171, 128
        $region36: #{tpu_custom_call.1} parent=31 // pred_fallthru
          _
        // Predicated region
        $region37: #{tpu_custom_call.1} parent=31 // pred_check
          %p179 = pneg %p63
        $region38: #{tpu_custom_call.1} parent=31 // pred_check_branch
          %181 = sbr.rel (%p179) target = $region40
        $region39: #{tpu_custom_call.1} parent=31 // pred_region
          %182 = dma.done [#allocation6], 512
        $region40: #{tpu_custom_call.1} parent=31 // pred_fallthru
          _
        %s183 = sand.u32 %s29, 1
        %s184 = scalar_lea.sflag [#allocation3], %s183
        %s185 = sand.u32 %s29, 1
        %s186 = smul.addr %s185, 8
        %s187 = scalar_lea.vmem [#allocation2], %s186
        %p188 = pneg %p42
        %p189 = pneg %p39
        %p190 = pneg %p63
        %p191 = pneg %p60
        %p192 = pneg %p84
        %p193 = pneg %p81
        %p194 = pneg %p110
        %p195 = pneg %p107
        %s196 = sand.u32 %s97, 1
        %s197 = scalar_lea.sflag [#allocation4], %s196
        %s198 = sand.u32 %s97, 1
        %s199 = smul.addr %s198, 8
        %s200 = scalar_lea.vmem [#allocation7], %s199
        %v201 = vld [vmem:[%s174] sm:$0xff]
        %vm202 = vcmask 261120
        %v203 = vsel %vm202, %v201, inf
        %v204 = vrot.slane %v203, 4
        %v205 = vmin.f32 %v203, %v204
        %v206 = vrot.slane %v205, 2
        %v207 = vmin.f32 %v205, %v206
        %v208 = vrot.slane %v207, 1
        %v209 = vmin.f32 %v207, %v208
        %v210 = vsub.f32 %v201, %v209
        %v211 = vld [vmem:[#allocation5] sm:$0xff]
        %v212 = vld [vmem:[#allocation5 + $0x8] sm:$0xff]
        %v213 = vld [vmem:[#allocation5 + $0x10] sm:$0xff]
        %v214 = vld [vmem:[#allocation5 + $0x18] sm:$0xff]
        %v215 = vld [vmem:[%s2] sm:$0x1]
        %v217 = vlaneseq
        %v218 = vshrl.u32 %v217, 7
        %v219 = vsub.s32 0, %v218
        %v220 = vrot.slane %v215, %v219
        %v223 = vsel %vm202, %v210, 0
        %225 = vmatprep.subr.mxu0 0.0
        %226 = vmatpush1.msra.mxu0 %v211
        %227 = vmatprep.subr.mxu0 0.0
        %228 = vmatpush1.msra.mxu0 %v212
        %229 = vmatprep.subr.mxu0 0.0
        %230 = vmatpush1.msra.mxu0 %v213
        %231 = vmatprep.subr.mxu0 0.0
        %232 = vmatpush1.msra.mxu0 %v214
        %233 = vmatprep.subr.mxu0 0.0
        %234 = vmatpush1.msra.mxu0 0.0
        %235 = vmatprep.subr.mxu0 0.0
        %236 = vmatpush1.msra.mxu0 0.0
        %237 = vmatprep.subr.mxu0 0.0
        %238 = vmatpush1.msra.mxu0 0.0
        %239 = vmatprep.subr.mxu0 0.0
        %240 = vmatpush1.msra.mxu0 0.0
        %241 = vmatprep.subr.mxu0 0.0
        %242 = vmatpush1.msra.mxu0 0.0
        %243 = vmatprep.subr.mxu0 0.0
        %244 = vmatpush1.msra.mxu0 0.0
        %245 = vmatprep.subr.mxu0 0.0
        %246 = vmatpush1.msra.mxu0 0.0
        %247 = vmatprep.subr.mxu0 0.0
        %248 = vmatpush1.msra.mxu0 0.0
        %249 = vmatprep.subr.mxu0 0.0
        %250 = vmatpush1.msra.mxu0 0.0
        %251 = vmatprep.subr.mxu0 0.0
        %252 = vmatpush1.msra.mxu0 0.0
        %253 = vmatprep.subr.mxu0 0.0
        %254 = vmatpush1.msra.mxu0 0.0
        %255 = vmatprep.subr.mxu0 0.0
        %256 = vmatpush1.msra.mxu0 0.0
        %257 = vmatprep.subr.mxu0 0.0
        %258 = vmatpush1.msra.mxu0 0.0
        %259 = vmatprep.subr.mxu0 0.0
        %260 = vmatpush1.msra.mxu0 0.0
        %261 = vmatprep.subr.mxu0 0.0
        %262 = vmatpush1.msra.mxu0 0.0
        %263 = vmatprep.subr.mxu0 0.0
        %264 = vmatpush1.msra.mxu0 0.0
        %265 = vmatprep.subr.mxu0 0.0
        %266 = vmatpush1.msra.mxu0 0.0
        %267 = vmatprep.subr.mxu0 0.0
        %268 = vmatpush1.msra.mxu0 0.0
        %269 = vmatprep.subr.mxu0 0.0
        %270 = vmatpush1.msra.mxu0 0.0
        %271 = vmatprep.subr.mxu0 0.0
        %272 = vmatpush1.msra.mxu0 0.0
        %273 = vmatprep.subr.mxu0 0.0
        %274 = vmatpush1.msra.mxu0 0.0
        %275 = vmatprep.subr.mxu0 0.0
        %276 = vmatpush1.msra.mxu0 0.0
        %277 = vmatprep.subr.mxu0 0.0
        %278 = vmatpush1.msra.mxu0 0.0
        %279 = vmatprep.subr.mxu0 0.0
        %280 = vmatpush1.msra.mxu0 0.0
        %281 = vmatprep.subr.mxu0 0.0
        %282 = vmatpush1.msra.mxu0 0.0
        %283 = vmatprep.subr.mxu0 0.0
        %284 = vmatpush1.msra.mxu0 0.0
        %285 = vmatprep.subr.mxu0 0.0
        %286 = vmatpush1.msra.mxu0 0.0
        %287 = vmatprep.subr.mxu0 0.0
        %288 = vmatpush1.msra.mxu0 0.0
        %289 = vmatprep.mubr.f32.mxu0 0.0
        %290 = vmatmul.mubr.f32.gmra.mrb[0].mxu0 %v223
        %v291 = vpop.f32.mrb[0].mxu0
        %v292 = vadd.f32 %v220, %v291
        %v293 = vpop.f32.mrb[0].mxu0
        %294 = vdwg.mxu0
        %295 = vst [vmem:[%s200] sm:$0xff] %v292
        %s296 = sand.u32 %s97, 1
        %s297 = scalar_lea.sflag [#allocation4], %s296
        %s298 = sand.u32 %s97, 1
        %s299 = smul.addr %s298, 8
        %s300 = scalar_lea.vmem [#allocation7], %s299
        // Predicated region
        $region41: #{tpu_custom_call.1} parent=31 // pred_check
          %p301 = pneg %p107
        $region42: #{tpu_custom_call.1} parent=31 // pred_check_branch
          %303 = sbr.rel (%p301) target = $region44
        $region43: #{tpu_custom_call.1} parent=31 // pred_region
          %s305 = ssub.s32 128, 128
          %306 = vsyncadd %s297, %s305
          %s307 = smul.addr %s21, 128
          %s308 = scalar_lea.hbm %s3, %s307
          %s310 = sshll.u32 %s300, 4
          %s311 = int_to_ptr.vmem [resolvable:$true] %s310
          %313 = dma.vmem_to_hbm [thread:$0]  %s311, 128, %s308, %s297
        $region44: #{tpu_custom_call.1} parent=31 // pred_fallthru
          _
      $region32: #{tpu_custom_call.1} parent=5 // pred_fallthru
        _
      %p314 = scmp.le.s32.totalorder 2, %s16
      // Predicated region
      $region45: #{tpu_custom_call.1} parent=5 // pred_check
        %p315 = pneg %p314
      $region46: #{tpu_custom_call.1} parent=5 // pred_check_branch
        %317 = sbr.rel (%p315) target = $region48
      $region47: #{tpu_custom_call.1} parent=5 // pred_region
        %s318 = ssub.s32 %s16, 2
        // Predicated region
        $region49: #{tpu_custom_call.1} parent=47 // pred_check
          %p319 = pneg %p113
        $region50: #{tpu_custom_call.1} parent=47 // pred_check_branch
          %321 = sbr.rel (%p319) target = $region52
        $region51: #{tpu_custom_call.1} parent=47 // pred_region
          %s322 = sand.u32 %s98, 1
          %s323 = scalar_lea.sflag [#allocation4], %s322
          %s324 = sand.u32 %s98, 1
          %s325 = smul.addr %s324, 8
          %s326 = scalar_lea.vmem [#allocation7], %s325
          %327 = dma.done %s323, 128
        $region52: #{tpu_custom_call.1} parent=47 // pred_fallthru
          _
      $region48: #{tpu_custom_call.1} parent=5 // pred_fallthru
        _
    $region6: #{tpu_custom_call.1} parent=1 // loop_footer
      %s20 = sadd.s32 1, %s16
    $region7: #{tpu_custom_call.1} parent=1 // loop_footer_branch
      %15 = sbr.rel target = $region3
    $region8: #{tpu_custom_call.1} parent=1 // loop_exit
      _
    %328 = vsyncpa [#allocation3], 1
    %s329 = scalar_lea.sflag [#allocation3], 1
    %330 = vsyncpa %s329, 1
    %331 = vsyncpa [#allocation6], 1
    %332 = vsyncpa [#allocation4], 1
    %s333 = scalar_lea.sflag [#allocation4], 1
    %334 = vsyncpa %s333, 1

// kernel: tpu_custom_call.1
$region0: #{tpu_custom_call.1}
  #allocation0 [shape = 'u32[]', space=smem, size = 0x4, offset = 0x4, fixed_abs, tag = 'smem constant byte address 0x4 - core index']
  #allocation1 [shape = 'u32[144,128]{1,0:T(1,128)}', space=vmem, size = 0x12000, scoped, tag = 'internal scratch']
  %s0 = inlined_call_operand.hbm [shape: f32[2,8,32], index: 0, kind: input, shape index: {}]
  %s1 = inlined_call_operand.hbm [shape: f32[32,128], index: 1, kind: input, shape index: {}]
  %s2 = inlined_call_operand.vmem [shape: f32[1,128], index: 2, kind: input, shape index: {}]
  %s3 = inlined_call_operand.hbm [shape: f32[2,8,128], index: 3, kind: output, shape index: {}]
  %s4 = sld [smem:[#allocation0]]
  $region53: #{tpu_custom_call.1} parent=0
    _
  %s6 = ssub.s32 1, %s4
  %s7 = scalar_select 0, %s6, %s4
  $region1: #{tpu_custom_call.1} parent=0
    #allocation2 [shape = 'u8[8192]{0}', space=vmem, size = 0x2000, scoped, tag = 'input window, operand 0']
    #allocation3 [shape = 's32[2]{0}', space=sflag, size = 0x8, scoped, tag = 'scoped memory for tpu_custom_call.1']
    #allocation4 [shape = 's32[2]{0}', space=sflag, size = 0x8, scoped, tag = 'scoped memory for tpu_custom_call.1']
    #allocation5 [shape = 'u8[16384]{0}', space=vmem, size = 0x4000, scoped, tag = 'input window, operand 1, single buffered']
    #allocation6 [shape = 's32[1]{0}', space=sflag, size = 0x4, scoped, tag = 'scoped memory for tpu_custom_call.1']
    #allocation7 [shape = 'u8[8192]{0}', space=vmem, size = 0x2000, scoped, tag = 'output window, operand 0']
    %8 = vsyncpa [#allocation3], 0
    %s9 = scalar_lea.sflag [#allocation3], 1
    %10 = vsyncpa %s9, 0
    %11 = vsyncpa [#allocation6], 0
    %12 = vsyncpa [#allocation4], 0
    %s13 = scalar_lea.sflag [#allocation4], 1
    %14 = vsyncpa %s13, 0
    loop: start=0, step=1, limit=4
    $region2: #{tpu_custom_call.1} parent=1 // loop_pre_header
      _
    $region3: #{tpu_custom_call.1} parent=1 // loop_header
      %s16 = sphi 0, %s20
      %p17 = scmp.ge.s32.totalorder %s16, 4
      %s26 = sphi 0, %s28
      %s29 = sphi 0, %s26
      %s30 = sphi 0, %s29
      %s46 = sphi 0, %s30
      %s50 = sphi 0, %s50
      %s52 = sphi 0, %s50
      %s53 = sphi 0, %s52
      %s67 = sphi 0, %s53
      %s71 = sphi 0, %s71
      %s73 = sphi 0, %s71
      %s74 = sphi 0, %s73
      %s88 = sphi 0, %s74
      %s94 = sphi 0, %s96
      %s97 = sphi 0, %s94
      %s98 = sphi 0, %s97
      %s114 = sphi 0, %s98
    $region4: #{tpu_custom_call.1} parent=1 // loop_header_branch
      %19 = sbr.rel (%p17) target = $region8
    $region5: #{tpu_custom_call.1} parent=1 // loop_body
      %s21 = ssub.s32 %s16, 1
      %s22 = ssub.s32 %s16, 2
      %s23 = sadd.s32 %s16, 1
      %s24 = ssub.s32 %s16, %s23
      %p25 = scmp.eq.s32.totalorder %s24, 0
      %s27 = sadd.s32 %s26, 1
      %s28 = scalar_select %p25, %s26, %s27
      %p31 = pneg %p25
      %p32 = scmp.eq.s32.totalorder %s16, 1
      %p33 = por %p31, %p32
      %p34 = scmp.ne.s32.totalorder %s26, %s29
      %p35 = scmp.eq.s32.totalorder %s16, 0
      %p36 = por %p34, %p35
      %p37 = scmp.ne.s32.totalorder %s26, %s29
      %p38 = scmp.eq.s32.totalorder %s21, 1
      %p39 = por %p37, %p38
      %p40 = scmp.ne.s32.totalorder %s29, %s30
      %p41 = scmp.eq.s32.totalorder %s21, 0
      %p42 = por %p40, %p41
      %p43 = scmp.ne.s32.totalorder %s29, %s30
      %p44 = scmp.eq.s32.totalorder %s22, 1
      %p45 = por %p43, %p44
      %p47 = scmp.ne.s32.totalorder %s30, %s46
      %p48 = scmp.eq.s32.totalorder %s22, 0
      %p49 = por %p47, %p48
      %s51 = sadd.s32 %s50, 1
      %p54 = scmp.eq.s32.totalorder %s16, 1
      %p55 = scmp.ne.s32.totalorder %s50, %s52
      %p56 = scmp.eq.s32.totalorder %s16, 0
      %p57 = por %p55, %p56
      %p58 = scmp.ne.s32.totalorder %s50, %s52
      %p59 = scmp.eq.s32.totalorder %s21, 1
      %p60 = por %p58, %p59
      %p61 = scmp.ne.s32.totalorder %s52, %s53
      %p62 = scmp.eq.s32.totalorder %s21, 0
      %p63 = por %p61, %p62
      %p64 = scmp.ne.s32.totalorder %s52, %s53
      %p65 = scmp.eq.s32.totalorder %s22, 1
      %p66 = por %p64, %p65
      %p68 = scmp.ne.s32.totalorder %s53, %s67
      %p69 = scmp.eq.s32.totalorder %s22, 0
      %p70 = por %p68, %p69
      %s72 = sadd.s32 %s71, 1
      %p75 = scmp.eq.s32.totalorder %s16, 1
      %p76 = scmp.ne.s32.totalorder %s71, %s73
      %p77 = scmp.eq.s32.totalorder %s16, 0
      %p78 = por %p76, %p77
      %p79 = scmp.ne.s32.totalorder %s71, %s73
      %p80 = scmp.eq.s32.totalorder %s21, 1
      %p81 = por %p79, %p80
      %p82 = scmp.ne.s32.totalorder %s73, %s74
      %p83 = scmp.eq.s32.totalorder %s21, 0
      %p84 = por %p82, %p83
      %p85 = scmp.ne.s32.totalorder %s73, %s74
      %p86 = scmp.eq.s32.totalorder %s22, 1
      %p87 = por %p85, %p86
      %p89 = scmp.ne.s32.totalorder %s74, %s88
      %p90 = scmp.eq.s32.totalorder %s22, 0
      %p91 = por %p89, %p90
      %s92 = ssub.s32 %s16, %s23
      %p93 = scmp.eq.s32.totalorder %s92, 0
      %s95 = sadd.s32 %s94, 1
      %s96 = scalar_select %p93, %s94, %s95
      %p99 = pneg %p93
      %p100 = scmp.eq.s32.totalorder %s16, 1
      %p101 = por %p99, %p100
      %p102 = scmp.ne.s32.totalorder %s94, %s97
      %p103 = scmp.eq.s32.totalorder %s16, 0
      %p104 = por %p102, %p103
      %p105 = scmp.ne.s32.totalorder %s94, %s97
      %p106 = scmp.eq.s32.totalorder %s21, 1
      %p107 = por %p105, %p106
      %p108 = scmp.ne.s32.totalorder %s97, %s98
      %p109 = scmp.eq.s32.totalorder %s21, 0
      %p110 = por %p108, %p109
      %p111 = scmp.ne.s32.totalorder %s97, %s98
      %p112 = scmp.eq.s32.totalorder %s22, 1
      %p113 = por %p111, %p112
      %p115 = scmp.ne.s32.totalorder %s98, %s114
      %p116 = scmp.eq.s32.totalorder %s22, 0
      %p117 = por %p115, %p116
      %p118 = scmp.le.s32.totalorder 1, %s16
      %p119 = scmp.lt.s32.totalorder %s16, 3
      %p120 = pnand %p118, %p119
      %p121 = pneg %p120
      // Predicated region
      $region9: #{tpu_custom_call.1} parent=5 // pred_check
        _
      $region10: #{tpu_custom_call.1} parent=5 // pred_check_branch
        %123 = sbr.rel (%p120) target = $region12
      $region11: #{tpu_custom_call.1} parent=5 // pred_region
        %s124 = ssub.s32 %s16, 1
        // Predicated region
        $region13: #{tpu_custom_call.1} parent=11 // pred_check
          %p125 = pneg %p63
        $region14: #{tpu_custom_call.1} parent=11 // pred_check_branch
          %127 = sbr.rel (%p125) target = $region16
        $region15: #{tpu_custom_call.1} parent=11 // pred_region
          %s129 = ssub.s32 512, 512
          %130 = vsyncadd [#allocation6], %s129
          %s131 = sshll.u32 [#allocation5], 4
          %s132 = int_to_ptr.vmem [resolvable:$true] %s131
          %137 = dma.hbm_to_vmem [thread:$0]  %s1, 512, %s132, [#allocation6], 128, 128, 8
        $region16: #{tpu_custom_call.1} parent=11 // pred_fallthru
          _
        // Predicated region
        $region17: #{tpu_custom_call.1} parent=11 // pred_check
          %p138 = pneg %p84
        $region18: #{tpu_custom_call.1} parent=11 // pred_check_branch
          %140 = sbr.rel (%p138) target = $region20
        $region19: #{tpu_custom_call.1} parent=11 // pred_region
          _
        $region20: #{tpu_custom_call.1} parent=11 // pred_fallthru
          _
      $region12: #{tpu_custom_call.1} parent=5 // pred_fallthru
        _
      %p141 = scmp.lt.s32.totalorder %s16, 2
      // Predicated region
      $region21: #{tpu_custom_call.1} parent=5 // pred_check
        %p142 = pneg %p141
      $region22: #{tpu_custom_call.1} parent=5 // pred_check_branch
        %144 = sbr.rel (%p142) target = $region24
      $region23: #{tpu_custom_call.1} parent=5 // pred_region
        // Predicated region
        $region25: #{tpu_custom_call.1} parent=23 // pred_check
          %p145 = pneg %p36
        $region26: #{tpu_custom_call.1} parent=23 // pred_check_branch
          %147 = sbr.rel (%p145) target = $region28
        $region27: #{tpu_custom_call.1} parent=23 // pred_region
          %s148 = sand.u32 %s26, 1
          %s149 = scalar_lea.sflag [#allocation3], %s148
          %s150 = sand.u32 %s26, 1
          %s151 = smul.addr %s150, 8
          %s152 = scalar_lea.vmem [#allocation2], %s151
          %s154 = ssub.s32 128, 128
          %155 = vsyncadd %s149, %s154
          %s156 = smul.addr %s16, 128
          %s157 = scalar_lea.hbm %s0, %s156
          %s159 = sshll.u32 %s152, 4
          %s160 = int_to_ptr.vmem [resolvable:$true] %s159
          %162 = dma.hbm_to_vmem [thread:$0]  %s157, 128, %s160, %s149
        $region28: #{tpu_custom_call.1} parent=23 // pred_fallthru
          _
      $region24: #{tpu_custom_call.1} parent=5 // pred_fallthru
        _
      %p163 = scmp.le.s32.totalorder 1, %s16
      %p164 = scmp.lt.s32.totalorder %s16, 3
      %p165 = pnand %p163, %p164
      %p166 = pneg %p165
      // Predicated region
      $region29: #{tpu_custom_call.1} parent=5 // pred_check
        _
      $region30: #{tpu_custom_call.1} parent=5 // pred_check_branch
        %168 = sbr.rel (%p165) target = $region32
      $region31: #{tpu_custom_call.1} parent=5 // pred_region
        %s169 = ssub.s32 %s16, 1
        %s170 = sand.u32 %s29, 1
        %s171 = scalar_lea.sflag [#allocation3], %s170
        %s172 = sand.u32 %s29, 1
        %s173 = smul.addr %s172, 8
        %s174 = scalar_lea.vmem [#allocation2], %s173
        // Predicated region
        $region33: #{tpu_custom_call.1} parent=31 // pred_check
          %p175 = pneg %p42
        $region34: #{tpu_custom_call.1} parent=31 // pred_check_branch
          %177 = sbr.rel (%p175) target = $region36
        $region35: #{tpu_custom_call.1} parent=31 // pred_region
          %178 = dma.done %s171, 128
        $region36: #{tpu_custom_call.1} parent=31 // pred_fallthru
          _
        // Predicated region
        $region37: #{tpu_custom_call.1} parent=31 // pred_check
          %p179 = pneg %p63
        $region38: #{tpu_custom_call.1} parent=31 // pred_check_branch
          %181 = sbr.rel (%p179) target = $region40
        $region39: #{tpu_custom_call.1} parent=31 // pred_region
          %182 = dma.done [#allocation6], 512
        $region40: #{tpu_custom_call.1} parent=31 // pred_fallthru
          _
        %s183 = sand.u32 %s29, 1
        %s184 = scalar_lea.sflag [#allocation3], %s183
        %s185 = sand.u32 %s29, 1
        %s186 = smul.addr %s185, 8
        %s187 = scalar_lea.vmem [#allocation2], %s186
        %p188 = pneg %p42
        %p189 = pneg %p39
        %p190 = pneg %p63
        %p191 = pneg %p60
        %p192 = pneg %p84
        %p193 = pneg %p81
        %p194 = pneg %p110
        %p195 = pneg %p107
        %s196 = sand.u32 %s97, 1
        %s197 = scalar_lea.sflag [#allocation4], %s196
        %s198 = sand.u32 %s97, 1
        %s199 = smul.addr %s198, 8
        %s200 = scalar_lea.vmem [#allocation7], %s199
        %v201 = vld [vmem:[%s174] sm:$0xff]
        %vm202 = vcmask 261120
        %v203 = vsel %vm202, %v201, inf
        %v204 = vrot.slane %v203, 4
        %v205 = vmin.f32 %v203, %v204
        %v206 = vrot.slane %v205, 2
        %v207 = vmin.f32 %v205, %v206
        %v208 = vrot.slane %v207, 1
        %v209 = vmin.f32 %v207, %v208
        %v210 = vsub.f32 %v201, %v209
        %v211 = vld [vmem:[#allocation5] sm:$0xff]
        %v212 = vld [vmem:[#allocation5 + $0x8] sm:$0xff]
        %v213 = vld [vmem:[#allocation5 + $0x10] sm:$0xff]
        %v214 = vld [vmem:[#allocation5 + $0x18] sm:$0xff]
        %v215 = vld [vmem:[%s2] sm:$0x1]
        %v217 = vlaneseq
        %v218 = vshrl.u32 %v217, 7
        %v219 = vsub.s32 0, %v218
        %v220 = vrot.slane %v215, %v219
        %v223 = vsel %vm202, %v210, 0
        %225 = vmatprep.subr.mxu0 0.0
        %226 = vmatpush1.msra.mxu0 %v211
        %227 = vmatprep.subr.mxu0 0.0
        %228 = vmatpush1.msra.mxu0 %v212
        %229 = vmatprep.subr.mxu0 0.0
        %230 = vmatpush1.msra.mxu0 %v213
        %231 = vmatprep.subr.mxu0 0.0
        %232 = vmatpush1.msra.mxu0 %v214
        %233 = vmatprep.subr.mxu0 0.0
        %234 = vmatpush1.msra.mxu0 0.0
        %235 = vmatprep.subr.mxu0 0.0
        %236 = vmatpush1.msra.mxu0 0.0
        %237 = vmatprep.subr.mxu0 0.0
        %238 = vmatpush1.msra.mxu0 0.0
        %239 = vmatprep.subr.mxu0 0.0
        %240 = vmatpush1.msra.mxu0 0.0
        %241 = vmatprep.subr.mxu0 0.0
        %242 = vmatpush1.msra.mxu0 0.0
        %243 = vmatprep.subr.mxu0 0.0
        %244 = vmatpush1.msra.mxu0 0.0
        %245 = vmatprep.subr.mxu0 0.0
        %246 = vmatpush1.msra.mxu0 0.0
        %247 = vmatprep.subr.mxu0 0.0
        %248 = vmatpush1.msra.mxu0 0.0
        %249 = vmatprep.subr.mxu0 0.0
        %250 = vmatpush1.msra.mxu0 0.0
        %251 = vmatprep.subr.mxu0 0.0
        %252 = vmatpush1.msra.mxu0 0.0
        %253 = vmatprep.subr.mxu0 0.0
        %254 = vmatpush1.msra.mxu0 0.0
        %255 = vmatprep.subr.mxu0 0.0
        %256 = vmatpush1.msra.mxu0 0.0
        %257 = vmatprep.subr.mxu0 0.0
        %258 = vmatpush1.msra.mxu0 0.0
        %259 = vmatprep.subr.mxu0 0.0
        %260 = vmatpush1.msra.mxu0 0.0
        %261 = vmatprep.subr.mxu0 0.0
        %262 = vmatpush1.msra.mxu0 0.0
        %263 = vmatprep.subr.mxu0 0.0
        %264 = vmatpush1.msra.mxu0 0.0
        %265 = vmatprep.subr.mxu0 0.0
        %266 = vmatpush1.msra.mxu0 0.0
        %267 = vmatprep.subr.mxu0 0.0
        %268 = vmatpush1.msra.mxu0 0.0
        %269 = vmatprep.subr.mxu0 0.0
        %270 = vmatpush1.msra.mxu0 0.0
        %271 = vmatprep.subr.mxu0 0.0
        %272 = vmatpush1.msra.mxu0 0.0
        %273 = vmatprep.subr.mxu0 0.0
        %274 = vmatpush1.msra.mxu0 0.0
        %275 = vmatprep.subr.mxu0 0.0
        %276 = vmatpush1.msra.mxu0 0.0
        %277 = vmatprep.subr.mxu0 0.0
        %278 = vmatpush1.msra.mxu0 0.0
        %279 = vmatprep.subr.mxu0 0.0
        %280 = vmatpush1.msra.mxu0 0.0
        %281 = vmatprep.subr.mxu0 0.0
        %282 = vmatpush1.msra.mxu0 0.0
        %283 = vmatprep.subr.mxu0 0.0
        %284 = vmatpush1.msra.mxu0 0.0
        %285 = vmatprep.subr.mxu0 0.0
        %286 = vmatpush1.msra.mxu0 0.0
        %287 = vmatprep.subr.mxu0 0.0
        %288 = vmatpush1.msra.mxu0 0.0
        %289 = vmatprep.mubr.f32.mxu0 0.0
        %290 = vmatmul.mubr.f32.gmra.mrb[0].mxu0 %v223
        %v291 = vpop.f32.mrb[0].mxu0
        %v292 = vadd.f32 %v220, %v291
        %v293 = vpop.f32.mrb[0].mxu0
        %294 = vdwg.mxu0
        %295 = vst [vmem:[%s200] sm:$0xff] %v292
        %s296 = sand.u32 %s97, 1
        %s297 = scalar_lea.sflag [#allocation4], %s296
        %s298 = sand.u32 %s97, 1
        %s299 = smul.addr %s298, 8
        %s300 = scalar_lea.vmem [#allocation7], %s299
        // Predicated region
        $region41: #{tpu_custom_call.1} parent=31 // pred_check
          %p301 = pneg %p107
        $region42: #{tpu_custom_call.1} parent=31 // pred_check_branch
          %303 = sbr.rel (%p301) target = $region44
        $region43: #{tpu_custom_call.1} parent=31 // pred_region
          %s305 = ssub.s32 128, 128
          %306 = vsyncadd %s297, %s305
          %s307 = smul.addr %s21, 128
          %s308 = scalar_lea.hbm %s3, %s307
          %s310 = sshll.u32 %s300, 4
          %s311 = int_to_ptr.vmem [resolvable:$true] %s310
          %313 = dma.vmem_to_hbm [thread:$0]  %s311, 128, %s308, %s297
        $region44: #{tpu_custom_call.1} parent=31 // pred_fallthru
          _
      $region32: #{tpu_custom_call.1} parent=5 // pred_fallthru
        _
      %p314 = scmp.le.s32.totalorder 2, %s16
      // Predicated region
      $region45: #{tpu_custom_call.1} parent=5 // pred_check
        %p315 = pneg %p314
      $region46: #{tpu_custom_call.1} parent=5 // pred_check_branch
        %317 = sbr.rel (%p315) target = $region48
      $region47: #{tpu_custom_call.1} parent=5 // pred_region
        %s318 = ssub.s32 %s16, 2
        // Predicated region
        $region49: #{tpu_custom_call.1} parent=47 // pred_check
          %p319 = pneg %p113
        $region50: #{tpu_custom_call.1} parent=47 // pred_check_branch
          %321 = sbr.rel (%p319) target = $region52
        $region51: #{tpu_custom_call.1} parent=47 // pred_region
          %s322 = sand.u32 %s98, 1
          %s323 = scalar_lea.sflag [#allocation4], %s322
          %s324 = sand.u32 %s98, 1
          %s325 = smul.addr %s324, 8
          %s326 = scalar_lea.vmem [#allocation7], %s325
          %327 = dma.done %s323, 128
        $region52: #{tpu_custom_call.1} parent=47 // pred_fallthru
          _
      $region48: #{tpu_custom_call.1} parent=5 // pred_fallthru
        _
    $region6: #{tpu_custom_call.1} parent=1 // loop_footer
      %s20 = sadd.s32 1, %s16
    $region7: #{tpu_custom_call.1} parent=1 // loop_footer_branch
      %15 = sbr.rel target = $region3
    $region8: #{tpu_custom_call.1} parent=1 // loop_exit
      _
    %328 = vsyncpa [#allocation3], 1
    %s329 = scalar_lea.sflag [#allocation3], 1
    %330 = vsyncpa %s329, 1
    %331 = vsyncpa [#allocation6], 1
    %332 = vsyncpa [#allocation4], 1
    %s333 = scalar_lea.sflag [#allocation4], 1
    %334 = vsyncpa %s333, 1

</llo_original>
